<compile_context>
chip_gen: v7x
topology: tpu7x:2x2x1
jax: 0.10.0
libtpu: 0.0.40
codegen_flags: <defaults>
</compile_context>

<pallas_src>
import math
import jax
import jax.numpy as jnp
from jax.experimental import pallas as pl
from jax.experimental.pallas import tpu as pltpu


# ---------------------------------------------------------------------------
# Kernel 1: LayerNorm + (Linear-GELU-Linear) x 2 over ALL prior tokens at once.
# Single program (no grid): priors reshaped to (B*N, in_dim) outside.
# ---------------------------------------------------------------------------
def _gelu(x):
    # TODO(synk): torch nn.GELU default is exact (erf); tanh approximation used
    # here for robust Mosaic lowering — max abs deviation ~1e-3.
    return jax.nn.gelu(x, approximate=True)


def _weights_kernel(priors_ref, gamma_ref, beta_ref,
                    w1a_ref, b1a_ref, w1b_ref, b1b_ref,
                    w2a_ref, b2a_ref, w2b_ref, b2b_ref,
                    out_ref):
    p = priors_ref[...]                                          # (M, in_dim), M = B*N
    mean = jnp.mean(p, axis=-1, keepdims=True)
    var = jnp.mean(jnp.square(p - mean), axis=-1, keepdims=True)
    pn = (p - mean) * jax.lax.rsqrt(var + 1e-5)                  # LayerNorm eps=1e-5
    pn = pn * gamma_ref[...] + beta_ref[...]                     # (1, in_dim) broadcast

    # TODO(synk): if bit-level fp32 parity with torch matmul is needed, add
    # precision=jax.lax.Precision.HIGHEST to these dots (not the hot path).
    # Mlp #1: Linear(in,in) -> GELU -> Linear(in,out)
    h = jnp.dot(pn, w1a_ref[...], preferred_element_type=jnp.float32) + b1a_ref[...]
    h = _gelu(h)
    h = jnp.dot(h, w1b_ref[...], preferred_element_type=jnp.float32) + b1b_ref[...]
    # Mlp #2: Linear(out,out) -> GELU -> Linear(out,out)
    h = jnp.dot(h, w2a_ref[...], preferred_element_type=jnp.float32) + b2a_ref[...]
    h = _gelu(h)
    h = jnp.dot(h, w2b_ref[...], preferred_element_type=jnp.float32) + b2b_ref[...]

    out_ref[...] = h.astype(out_ref.dtype)


def compute_prior_weights(priors, params):
    """priors: (B, N, in_dim) -> weights: (B, N, out_dim)."""
    B, N, in_dim = priors.shape
    out_dim = params["w2b"].shape[1]
    priors2d = priors.reshape(B * N, in_dim)          # free reshape (leading dims)

    w2d = pl.pallas_call(
        _weights_kernel,
        out_shape=jax.ShapeDtypeStruct((B * N, out_dim), jnp.float32),
    )(priors2d,
      params["ln_gamma"], params["ln_beta"],
      params["w1a"], params["b1a"], params["w1b"], params["b1b"],
      params["w2a"], params["b2a"], params["w2b"], params["b2b"])

    return w2d.reshape(B, N, out_dim)


# ---------------------------------------------------------------------------
# Kernel 2: the hot path.  out(B, N, S) = weights(B, N, C) @ x(B, C, S)
# Grid = (B, cdiv(S, tile_s)); weights tile resident per batch element;
# tile_s (lane-dense, multiple of 128) on the last dim of both x and out.
# ---------------------------------------------------------------------------
def _bmm_kernel(w_ref, x_ref, o_ref):
    # w_ref: (N, C), x_ref: (C, tile_s), o_ref: (N, tile_s)
    # TODO(synk): if upstream x / weights can live in bf16 in HBM, feed bf16
    # here (accumulation stays f32) to halve the dominant x read traffic.
    o_ref[...] = jnp.dot(w_ref[...], x_ref[...],
                         preferred_element_type=jnp.float32).astype(o_ref.dtype)


def bmm_weights_tokens(weights, x_flat, tile_s=1024):
    """weights: (B, N, C), x_flat: (B, C, S) -> (B, N, S)."""
    B, N, C = weights.shape
    _, _, S = x_flat.shape

    if S <= tile_s:
        tile_s = S                                    # full-extent block: always legal
    else:
        tile_s = max(128, (tile_s // 128) * 128)      # lane-aligned tile; last block
                                                      # may be partial (Pallas pads it,
                                                      # padded lanes never escape)
    grid = (B, pl.cdiv(S, tile_s))

    return pl.pallas_call(
        _bmm_kernel,
        out_shape=jax.ShapeDtypeStruct((B, N, S), jnp.float32),
        grid=grid,
        in_specs=[
            pl.BlockSpec((None, N, C), lambda b, s: (b, 0, 0)),        # weights resident
            pl.BlockSpec((None, C, tile_s), lambda b, s: (b, 0, s)),   # lane-dense x tile
        ],
        out_specs=pl.BlockSpec((None, N, tile_s), lambda b, s: (b, 0, s)),  # lane-dense out
        compiler_params=pltpu.CompilerParams(
            dimension_semantics=("parallel", "parallel")),
    )(weights, x_flat)


# ---------------------------------------------------------------------------
# Module wrapper — no transposes, only free reshapes.
# ---------------------------------------------------------------------------
def hierarchy_prior_classifier(x, prior_list, params):
    priors = jnp.concatenate(prior_list, axis=2)          # (B, N, in_dim)
    weights = compute_prior_weights(priors, params)       # (B, N, out_dim)

    B, C, D, H, W = x.shape
    S = D * H * W
    x_flat = x.reshape(B, C, S)                           # free reshape (NCDHW kept)
    out = bmm_weights_tokens(weights, x_flat)             # (B, N, S)
    N = weights.shape[1]
    return out.reshape(B, N, D, H, W)                     # free reshape


# ---------------------------------------------------------------------------
# Pure-JAX reference of the full forward (for correctness cross-check).
# ---------------------------------------------------------------------------
def _reference_forward(x, prior_list, params):
    priors = jnp.concatenate(prior_list, axis=2)
    mean = jnp.mean(priors, axis=-1, keepdims=True)
    var = jnp.mean(jnp.square(priors - mean), axis=-1, keepdims=True)
    pn = (priors - mean) * jax.lax.rsqrt(var + 1e-5)
    pn = pn * params["ln_gamma"][0] + params["ln_beta"][0]

    h = _gelu(pn @ params["w1a"] + params["b1a"][0]) @ params["w1b"] + params["b1b"][0]
    h = _gelu(h @ params["w2a"] + params["b2a"][0]) @ params["w2b"] + params["b2b"][0]

    B, C, D, H, W = x.shape
    out = jnp.einsum("bnc,bcs->bns", h, x.reshape(B, C, -1))
    return out.reshape(B, h.shape[1], D, H, W)


# ---------------------------------------------------------------------------
# Deterministic parameter init (matches module __init__ semantics).
# ---------------------------------------------------------------------------
def init_params(key, in_dim, out_dim):
    def xavier(k, fan_in, fan_out):
        bound = math.sqrt(6.0 / (fan_in + fan_out))
        return jax.random.uniform(k, (fan_in, fan_out), jnp.float32, -bound, bound)

    k1, k2, k3, k4 = jax.random.split(key, 4)
    return {
        # LayerNorm defaults (not touched by init_weights)
        "ln_gamma": jnp.ones((1, in_dim), jnp.float32),
        "ln_beta": jnp.zeros((1, in_dim), jnp.float32),
        # Mlp #1
        "w1a": xavier(k1, in_dim, in_dim), "b1a": jnp.zeros((1, in_dim), jnp.float32),
        "w1b": xavier(k2, in_dim, out_dim), "b1b": jnp.zeros((1, out_dim), jnp.float32),
        # Mlp #2
        "w2a": xavier(k3, out_dim, out_dim), "b2a": jnp.zeros((1, out_dim), jnp.float32),
        "w2b": xavier(k4, out_dim, out_dim), "b2b": jnp.zeros((1, out_dim), jnp.float32),
    }


if __name__ == "__main__":
    key = jax.random.PRNGKey(0)
    kx, kp1, kp2, kparam = jax.random.split(key, 4)

    B, C, D, H, W = 2, 16, 8, 8, 8      # feature map; C == out_dim
    N = 8                               # number of prior (class) tokens
    in_dim, out_dim = 32, C             # two priors of width 16 concat -> 32

    x = jax.random.normal(kx, (B, C, D, H, W), jnp.float32)
    prior_list = [
        jax.random.normal(kp1, (B, N, 16), jnp.float32),
        jax.random.normal(kp2, (B, N, 16), jnp.float32),
    ]
    params = init_params(kparam, in_dim, out_dim)

    out = hierarchy_prior_classifier(x, prior_list, params)
    out = jax.block_until_ready(out)
    assert out.shape == (B, N, D, H, W), out.shape
    assert jnp.all(jnp.isfinite(out))

    # Correctness cross-check against a plain-JAX reference of the full forward.
    ref = jax.block_until_ready(_reference_forward(x, prior_list, params))
    assert jnp.allclose(out, ref, atol=1e-4, rtol=1e-4)
    print("KERNEL_OK")
</pallas_src>

<mosaic_0001>
module attributes {stable_mosaic.version = 11 : i64} {
  func.func @_weights_kernel(%arg0: memref<16x32xf32, #tpu.memory_space<vmem>>, %arg1: memref<1x32xf32, #tpu.memory_space<vmem>>, %arg2: memref<1x32xf32, #tpu.memory_space<vmem>>, %arg3: memref<32x32xf32, #tpu.memory_space<vmem>>, %arg4: memref<1x32xf32, #tpu.memory_space<vmem>>, %arg5: memref<32x16xf32, #tpu.memory_space<vmem>>, %arg6: memref<1x16xf32, #tpu.memory_space<vmem>>, %arg7: memref<16x16xf32, #tpu.memory_space<vmem>>, %arg8: memref<1x16xf32, #tpu.memory_space<vmem>>, %arg9: memref<16x16xf32, #tpu.memory_space<vmem>>, %arg10: memref<1x16xf32, #tpu.memory_space<vmem>>, %arg11: memref<16x16xf32, #tpu.memory_space<vmem>>) attributes {dimension_semantics = [], scalar_prefetch = 0 : i64, scratch_operands = 0 : i64, tpu.core_type = #tpu.core_type<tc>} {
    %c0 = arith.constant 0 : index
    %c0_0 = arith.constant 0 : index
    %0 = vector.load %arg0[%c0, %c0_0] : memref<16x32xf32, #tpu.memory_space<vmem>>, vector<16x32xf32>
    %cst = arith.constant dense<0.000000e+00> : vector<16xf32>
    %1 = vector.multi_reduction <add>, %0, %cst [1] : vector<16x32xf32> to vector<16xf32>
    %2 = vector.shape_cast %1 : vector<16xf32> to vector<16x1xf32>
    %cst_1 = arith.constant 3.200000e+01 : f32
    %3 = vector.broadcast %cst_1 : f32 to vector<16x1xf32>
    %4 = arith.divf %2, %3 : vector<16x1xf32>
    %5 = vector.broadcast %4 : vector<16x1xf32> to vector<16x32xf32>
    %6 = arith.subf %0, %5 : vector<16x32xf32>
    %7 = arith.mulf %6, %6 : vector<16x32xf32>
    %cst_2 = arith.constant dense<0.000000e+00> : vector<16xf32>
    %8 = vector.multi_reduction <add>, %7, %cst_2 [1] : vector<16x32xf32> to vector<16xf32>
    %9 = vector.shape_cast %8 : vector<16xf32> to vector<16x1xf32>
    %cst_3 = arith.constant 3.200000e+01 : f32
    %10 = vector.broadcast %cst_3 : f32 to vector<16x1xf32>
    %11 = arith.divf %9, %10 : vector<16x1xf32>
    %12 = vector.broadcast %4 : vector<16x1xf32> to vector<16x32xf32>
    %13 = arith.subf %0, %12 : vector<16x32xf32>
    %cst_4 = arith.constant 9.99999974E-6 : f32
    %14 = vector.broadcast %cst_4 : f32 to vector<16x1xf32>
    %15 = arith.addf %11, %14 : vector<16x1xf32>
    %16 = math.rsqrt %15 : vector<16x1xf32>
    %17 = vector.broadcast %16 : vector<16x1xf32> to vector<16x32xf32>
    %18 = arith.mulf %13, %17 : vector<16x32xf32>
    %c0_5 = arith.constant 0 : index
    %c0_6 = arith.constant 0 : index
    %19 = vector.load %arg1[%c0_5, %c0_6] : memref<1x32xf32, #tpu.memory_space<vmem>>, vector<1x32xf32>
    %20 = vector.broadcast %19 : vector<1x32xf32> to vector<16x32xf32>
    %21 = arith.mulf %18, %20 : vector<16x32xf32>
    %c0_7 = arith.constant 0 : index
    %c0_8 = arith.constant 0 : index
    %22 = vector.load %arg2[%c0_7, %c0_8] : memref<1x32xf32, #tpu.memory_space<vmem>>, vector<1x32xf32>
    %23 = vector.broadcast %22 : vector<1x32xf32> to vector<16x32xf32>
    %24 = arith.addf %21, %23 : vector<16x32xf32>
    %c0_9 = arith.constant 0 : index
    %c0_10 = arith.constant 0 : index
    %25 = vector.load %arg3[%c0_9, %c0_10] : memref<32x32xf32, #tpu.memory_space<vmem>>, vector<32x32xf32>
    %cst_11 = arith.constant dense<0.000000e+00> : vector<16x32xf32>
    %26 = tpu.matmul %24, %25, %cst_11 {dimension_numbers = #tpu.dot_dimension_numbers<[1], [0], [0], [1], [0, 0, 1, 1], [], []>} : vector<16x32xf32>, vector<32x32xf32>, vector<16x32xf32> -> vector<16x32xf32>
    %c0_12 = arith.constant 0 : index
    %c0_13 = arith.constant 0 : index
    %27 = vector.load %arg4[%c0_12, %c0_13] : memref<1x32xf32, #tpu.memory_space<vmem>>, vector<1x32xf32>
    %28 = vector.broadcast %27 : vector<1x32xf32> to vector<16x32xf32>
    %29 = arith.addf %26, %28 : vector<16x32xf32>
    %30 = arith.mulf %29, %29 : vector<16x32xf32>
    %31 = arith.mulf %29, %30 : vector<16x32xf32>
    %cst_14 = arith.constant 4.471500e-02 : f32
    %32 = vector.broadcast %cst_14 : f32 to vector<16x32xf32>
    %33 = arith.mulf %32, %31 : vector<16x32xf32>
    %34 = arith.addf %29, %33 : vector<16x32xf32>
    %cst_15 = arith.constant 0.797884583 : f32
    %35 = vector.broadcast %cst_15 : f32 to vector<16x32xf32>
    %36 = arith.mulf %35, %34 : vector<16x32xf32>
    %37 = math.tanh %36 : vector<16x32xf32>
    %cst_16 = arith.constant 1.000000e+00 : f32
    %38 = vector.broadcast %cst_16 : f32 to vector<16x32xf32>
    %39 = arith.addf %38, %37 : vector<16x32xf32>
    %cst_17 = arith.constant 5.000000e-01 : f32
    %40 = vector.broadcast %cst_17 : f32 to vector<16x32xf32>
    %41 = arith.mulf %40, %39 : vector<16x32xf32>
    %42 = arith.mulf %29, %41 : vector<16x32xf32>
    %c0_18 = arith.constant 0 : index
    %c0_19 = arith.constant 0 : index
    %43 = vector.load %arg5[%c0_18, %c0_19] : memref<32x16xf32, #tpu.memory_space<vmem>>, vector<32x16xf32>
    %cst_20 = arith.constant dense<0.000000e+00> : vector<16x16xf32>
    %44 = tpu.matmul %42, %43, %cst_20 {dimension_numbers = #tpu.dot_dimension_numbers<[1], [0], [0], [1], [0, 0, 1, 1], [], []>} : vector<16x32xf32>, vector<32x16xf32>, vector<16x16xf32> -> vector<16x16xf32>
    %c0_21 = arith.constant 0 : index
    %c0_22 = arith.constant 0 : index
    %45 = vector.load %arg6[%c0_21, %c0_22] : memref<1x16xf32, #tpu.memory_space<vmem>>, vector<1x16xf32>
    %46 = vector.broadcast %45 : vector<1x16xf32> to vector<16x16xf32>
    %47 = arith.addf %44, %46 : vector<16x16xf32>
    %c0_23 = arith.constant 0 : index
    %c0_24 = arith.constant 0 : index
    %48 = vector.load %arg7[%c0_23, %c0_24] : memref<16x16xf32, #tpu.memory_space<vmem>>, vector<16x16xf32>
    %cst_25 = arith.constant dense<0.000000e+00> : vector<16x16xf32>
    %49 = tpu.matmul %47, %48, %cst_25 {dimension_numbers = #tpu.dot_dimension_numbers<[1], [0], [0], [1], [0, 0, 1, 1], [], []>} : vector<16x16xf32>, vector<16x16xf32>, vector<16x16xf32> -> vector<16x16xf32>
    %c0_26 = arith.constant 0 : index
    %c0_27 = arith.constant 0 : index
    %50 = vector.load %arg8[%c0_26, %c0_27] : memref<1x16xf32, #tpu.memory_space<vmem>>, vector<1x16xf32>
    %51 = vector.broadcast %50 : vector<1x16xf32> to vector<16x16xf32>
    %52 = arith.addf %49, %51 : vector<16x16xf32>
    %53 = arith.mulf %52, %52 : vector<16x16xf32>
    %54 = arith.mulf %52, %53 : vector<16x16xf32>
    %cst_28 = arith.constant 4.471500e-02 : f32
    %55 = vector.broadcast %cst_28 : f32 to vector<16x16xf32>
    %56 = arith.mulf %55, %54 : vector<16x16xf32>
    %57 = arith.addf %52, %56 : vector<16x16xf32>
    %cst_29 = arith.constant 0.797884583 : f32
    %58 = vector.broadcast %cst_29 : f32 to vector<16x16xf32>
    %59 = arith.mulf %58, %57 : vector<16x16xf32>
    %60 = math.tanh %59 : vector<16x16xf32>
    %cst_30 = arith.constant 1.000000e+00 : f32
    %61 = vector.broadcast %cst_30 : f32 to vector<16x16xf32>
    %62 = arith.addf %61, %60 : vector<16x16xf32>
    %cst_31 = arith.constant 5.000000e-01 : f32
    %63 = vector.broadcast %cst_31 : f32 to vector<16x16xf32>
    %64 = arith.mulf %63, %62 : vector<16x16xf32>
    %65 = arith.mulf %52, %64 : vector<16x16xf32>
    %c0_32 = arith.constant 0 : index
    %c0_33 = arith.constant 0 : index
    %66 = vector.load %arg9[%c0_32, %c0_33] : memref<16x16xf32, #tpu.memory_space<vmem>>, vector<16x16xf32>
    %cst_34 = arith.constant dense<0.000000e+00> : vector<16x16xf32>
    %67 = tpu.matmul %65, %66, %cst_34 {dimension_numbers = #tpu.dot_dimension_numbers<[1], [0], [0], [1], [0, 0, 1, 1], [], []>} : vector<16x16xf32>, vector<16x16xf32>, vector<16x16xf32> -> vector<16x16xf32>
    %c0_35 = arith.constant 0 : index
    %c0_36 = arith.constant 0 : index
    %68 = vector.load %arg10[%c0_35, %c0_36] : memref<1x16xf32, #tpu.memory_space<vmem>>, vector<1x16xf32>
    %69 = vector.broadcast %68 : vector<1x16xf32> to vector<16x16xf32>
    %70 = arith.addf %67, %69 : vector<16x16xf32>
    %c0_37 = arith.constant 0 : index
    %c0_38 = arith.constant 0 : index
    %71 = vector.load %arg11[%c0_37, %c0_38] : memref<16x16xf32, #tpu.memory_space<vmem>>, vector<16x16xf32>
    tpu.vector_store %arg11[%c0_37, %c0_38], %70 {strides = array<i32>} : memref<16x16xf32, #tpu.memory_space<vmem>>, vector<16x16xf32>,
    return
  }
}

</mosaic_0001>

<llo_original>
// kernel: tpu_custom_call.1
$region0: #{tpu_custom_call.1}
  #allocation0 [shape = 'u32[]', space=smem, size = 0x4, offset = 0x4, fixed_abs, tag = 'smem constant byte address 0x4 - core index']
  #allocation1 [shape = 'u32[144,128]{1,0:T(1,128)}', space=vmem, size = 0x12000, scoped, tag = 'internal scratch']
  %s0 = inlined_call_operand.vmem [shape: f32[16,32], index: 0, kind: input, shape index: {}]
  %s1 = inlined_call_operand.vmem [shape: f32[1,32], index: 1, kind: input, shape index: {}]
  %s2 = inlined_call_operand.vmem [shape: f32[1,32], index: 2, kind: input, shape index: {}]
  %s3 = inlined_call_operand.vmem [shape: f32[32,32], index: 3, kind: input, shape index: {}]
  %s4 = inlined_call_operand.hbm [shape: f32[1,32], index: 4, kind: input, shape index: {}]
  %s5 = inlined_call_operand.vmem [shape: f32[32,16], index: 5, kind: input, shape index: {}]
  %s6 = inlined_call_operand.hbm [shape: f32[1,16], index: 6, kind: input, shape index: {}]
  %s7 = inlined_call_operand.hbm [shape: f32[16,16], index: 7, kind: input, shape index: {}]
  %s8 = inlined_call_operand.hbm [shape: f32[1,16], index: 8, kind: input, shape index: {}]
  %s9 = inlined_call_operand.vmem [shape: f32[16,16], index: 9, kind: input, shape index: {}]
  %s10 = inlined_call_operand.vmem [shape: f32[1,16], index: 10, kind: input, shape index: {}]
  %s11 = inlined_call_operand.hbm [shape: f32[16,16], index: 11, kind: output, shape index: {}]
  %s12 = sld [smem:[#allocation0]]
  $region70: #{tpu_custom_call.1} parent=0
    _
  %s14 = ssub.s32 1, %s12
  %s15 = scalar_select 0, %s14, %s12
  $region1: #{tpu_custom_call.1} parent=0
    #allocation2 [shape = 'u8[512]{0}', space=vmem, size = 0x400, scoped, tag = 'input window, operand 4, single buffered']
    #allocation3 [shape = 's32[1]{0}', space=sflag, size = 0x4, scoped, tag = 'scoped memory for tpu_custom_call.1']
    #allocation4 [shape = 's32[1]{0}', space=sflag, size = 0x4, scoped, tag = 'scoped memory for tpu_custom_call.1']
    #allocation5 [shape = 'u8[512]{0}', space=vmem, size = 0x400, scoped, tag = 'input window, operand 6, single buffered']
    #allocation6 [shape = 's32[1]{0}', space=sflag, size = 0x4, scoped, tag = 'scoped memory for tpu_custom_call.1']
    #allocation7 [shape = 'u8[8192]{0}', space=vmem, size = 0x2000, scoped, tag = 'input window, operand 7, single buffered']
    #allocation8 [shape = 'u8[512]{0}', space=vmem, size = 0x400, scoped, tag = 'input window, operand 8, single buffered']
    #allocation9 [shape = 's32[1]{0}', space=sflag, size = 0x4, scoped, tag = 'scoped memory for tpu_custom_call.1']
    #allocation10 [shape = 'u8[8192]{0}', space=vmem, size = 0x2000, scoped, tag = 'output window, operand 0, single buffered']
    %16 = vsyncpa [#allocation3], 0
    %17 = vsyncpa [#allocation6], 0
    %18 = vsyncpa [#allocation9], 0
    %19 = vsyncpa [#allocation4], 0
    // Predicated region
    $region2: #{tpu_custom_call.1} parent=1 // pred_check
      _
    $region3: #{tpu_custom_call.1} parent=1 // pred_check_branch
      %21 = sbr.rel (0) target = $region5
    $region4: #{tpu_custom_call.1} parent=1 // pred_region
      _
    $region5: #{tpu_custom_call.1} parent=1 // pred_fallthru
      _
    // Predicated region
    $region6: #{tpu_custom_call.1} parent=1 // pred_check
      _
    $region7: #{tpu_custom_call.1} parent=1 // pred_check_branch
      %23 = sbr.rel (0) target = $region9
    $region8: #{tpu_custom_call.1} parent=1 // pred_region
      _
    $region9: #{tpu_custom_call.1} parent=1 // pred_fallthru
      _
    // Predicated region
    $region10: #{tpu_custom_call.1} parent=1 // pred_check
      _
    $region11: #{tpu_custom_call.1} parent=1 // pred_check_branch
      %25 = sbr.rel (0) target = $region13
    $region12: #{tpu_custom_call.1} parent=1 // pred_region
      _
    $region13: #{tpu_custom_call.1} parent=1 // pred_fallthru
      _
    // Predicated region
    $region14: #{tpu_custom_call.1} parent=1 // pred_check
      _
    $region15: #{tpu_custom_call.1} parent=1 // pred_check_branch
      %27 = sbr.rel (0) target = $region17
    $region16: #{tpu_custom_call.1} parent=1 // pred_region
      _
    $region17: #{tpu_custom_call.1} parent=1 // pred_fallthru
      _
    // Predicated region
    $region18: #{tpu_custom_call.1} parent=1 // pred_check
      _
    $region19: #{tpu_custom_call.1} parent=1 // pred_check_branch
      %29 = sbr.rel (0) target = $region21
    $region20: #{tpu_custom_call.1} parent=1 // pred_region
      %s31 = ssub.s32 16, 16
      %32 = vsyncadd [#allocation3], %s31
      %s34 = sshll.u32 [#allocation2], 4
      %s35 = int_to_ptr.vmem [resolvable:$true] %s34
      %37 = dma.hbm_to_vmem [thread:$0]  %s4, 16, %s35, [#allocation3]
    $region21: #{tpu_custom_call.1} parent=1 // pred_fallthru
      _
    // Predicated region
    $region22: #{tpu_custom_call.1} parent=1 // pred_check
      _
    $region23: #{tpu_custom_call.1} parent=1 // pred_check_branch
      %39 = sbr.rel (0) target = $region25
    $region24: #{tpu_custom_call.1} parent=1 // pred_region
      _
    $region25: #{tpu_custom_call.1} parent=1 // pred_fallthru
      _
    // Predicated region
    $region26: #{tpu_custom_call.1} parent=1 // pred_check
      _
    $region27: #{tpu_custom_call.1} parent=1 // pred_check_branch
      %41 = sbr.rel (0) target = $region29
    $region28: #{tpu_custom_call.1} parent=1 // pred_region
      %s43 = ssub.s32 16, 16
      %44 = vsyncadd [#allocation6], %s43
      %s46 = sshll.u32 [#allocation5], 4
      %s47 = int_to_ptr.vmem [resolvable:$true] %s46
      %49 = dma.hbm_to_vmem [thread:$0]  %s6, 16, %s47, [#allocation6]
    $region29: #{tpu_custom_call.1} parent=1 // pred_fallthru
      _
    // Predicated region
    $region30: #{tpu_custom_call.1} parent=1 // pred_check
      _
    $region31: #{tpu_custom_call.1} parent=1 // pred_check_branch
      %51 = sbr.rel (0) target = $region33
    $region32: #{tpu_custom_call.1} parent=1 // pred_region
      %s53 = ssub.s32 256, 256
      %54 = vsyncadd [#allocation6], %s53
      %s55 = sshll.u32 [#allocation7], 4
      %s56 = int_to_ptr.vmem [resolvable:$true] %s55
      %61 = dma.hbm_to_vmem [thread:$0]  %s7, 256, %s56, [#allocation6], 128, 128, 8
    $region33: #{tpu_custom_call.1} parent=1 // pred_fallthru
      _
    // Predicated region
    $region34: #{tpu_custom_call.1} parent=1 // pred_check
      _
    $region35: #{tpu_custom_call.1} parent=1 // pred_check_branch
      %63 = sbr.rel (0) target = $region37
    $region36: #{tpu_custom_call.1} parent=1 // pred_region
      %s65 = ssub.s32 16, 16
      %66 = vsyncadd [#allocation9], %s65
      %s68 = sshll.u32 [#allocation8], 4
      %s69 = int_to_ptr.vmem [resolvable:$true] %s68
      %71 = dma.hbm_to_vmem [thread:$0]  %s8, 16, %s69, [#allocation9]
    $region37: #{tpu_custom_call.1} parent=1 // pred_fallthru
      _
    // Predicated region
    $region38: #{tpu_custom_call.1} parent=1 // pred_check
      _
    $region39: #{tpu_custom_call.1} parent=1 // pred_check_branch
      %73 = sbr.rel (0) target = $region41
    $region40: #{tpu_custom_call.1} parent=1 // pred_region
      _
    $region41: #{tpu_custom_call.1} parent=1 // pred_fallthru
      _
    // Predicated region
    $region42: #{tpu_custom_call.1} parent=1 // pred_check
      _
    $region43: #{tpu_custom_call.1} parent=1 // pred_check_branch
      %75 = sbr.rel (0) target = $region45
    $region44: #{tpu_custom_call.1} parent=1 // pred_region
      _
    $region45: #{tpu_custom_call.1} parent=1 // pred_fallthru
      _
    // Predicated region
    $region46: #{tpu_custom_call.1} parent=1 // pred_check
      _
    $region47: #{tpu_custom_call.1} parent=1 // pred_check_branch
      %77 = sbr.rel (0) target = $region49
    $region48: #{tpu_custom_call.1} parent=1 // pred_region
      %78 = dma.done [#allocation3], 16
    $region49: #{tpu_custom_call.1} parent=1 // pred_fallthru
      _
    // Predicated region
    $region50: #{tpu_custom_call.1} parent=1 // pred_check
      _
    $region51: #{tpu_custom_call.1} parent=1 // pred_check_branch
      %80 = sbr.rel (0) target = $region53
    $region52: #{tpu_custom_call.1} parent=1 // pred_region
      %81 = dma.done [#allocation6], 16
    $region53: #{tpu_custom_call.1} parent=1 // pred_fallthru
      _
    // Predicated region
    $region54: #{tpu_custom_call.1} parent=1 // pred_check
      _
    $region55: #{tpu_custom_call.1} parent=1 // pred_check_branch
      %83 = sbr.rel (0) target = $region57
    $region56: #{tpu_custom_call.1} parent=1 // pred_region
      %84 = dma.done [#allocation6], 256
    $region57: #{tpu_custom_call.1} parent=1 // pred_fallthru
      _
    // Predicated region
    $region58: #{tpu_custom_call.1} parent=1 // pred_check
      _
    $region59: #{tpu_custom_call.1} parent=1 // pred_check_branch
      %86 = sbr.rel (0) target = $region61
    $region60: #{tpu_custom_call.1} parent=1 // pred_region
      %87 = dma.done [#allocation9], 16
    $region61: #{tpu_custom_call.1} parent=1 // pred_fallthru
      _
    %v88 = vld [vmem:[%s0] sm:$0xff]
    %v89 = vld [vmem:[%s0 + $0x8] sm:$0xff]
    %vm90 = vcmask 261120
    %v91 = vsel %vm90, %v88, 0.0
    %92 = vadd.xlane.f32.xlu0 %v91
    %v93 = vpop.xlane.xlu0 %92
    %v94 = vsel %vm90, %v89, 0.0
    %95 = vadd.xlane.f32.xlu0 %v94
    %v96 = vpop.xlane.xlu0 %95
    %v97 = vrcp.pop 32.0
    %v98 = vmul.f32 %v93, %v97
    %v99 = vmul.f32 %v96, %v97
    %v100 = vsub.f32 %v88, %v98
    %v101 = vsub.f32 %v89, %v99
    %v102 = vmul.f32 %v100, %v100
    %v103 = vmul.f32 %v101, %v101
    %v104 = vsel %vm90, %v102, 0.0
    %105 = vadd.xlane.f32.xlu0 %v104
    %v106 = vpop.xlane.xlu0 %105
    %v107 = vsel %vm90, %v103, 0.0
    %108 = vadd.xlane.f32.xlu0 %v107
    %v109 = vpop.xlane.xlu0 %108
    %v110 = vmul.f32 %v106, %v97
    %v111 = vmul.f32 %v109, %v97
    %v112 = vadd.f32 %v110, 1e-05
    %v113 = vadd.f32 %v111, 1e-05
    %v114 = vrsqrt.pop %v112
    %v115 = vrsqrt.pop %v113
    %v116 = vmul.f32 %v100, %v114
    %v117 = vmul.f32 %v101, %v115
    %v118 = vld [vmem:[%s1] sm:$0x1]
    %v120 = vlaneseq
    %v121 = vshrl.u32 %v120, 7
    %v122 = vsub.s32 0, %v121
    %v123 = vrot.slane %v118, %v122
    %v125 = vmul.f32 %v116, %v123
    %v126 = vmul.f32 %v117, %v123
    %v127 = vld [vmem:[%s2] sm:$0x1]
    %v129 = vlaneseq
    %v130 = vshrl.u32 %v129, 7
    %v131 = vsub.s32 0, %v130
    %v132 = vrot.slane %v127, %v131
    %v134 = vadd.f32 %v125, %v132
    %v135 = vadd.f32 %v126, %v132
    %v136 = vld [vmem:[%s3] sm:$0xff]
    %v137 = vld [vmem:[%s3 + $0x8] sm:$0xff]
    %v138 = vld [vmem:[%s3 + $0x10] sm:$0xff]
    %v139 = vld [vmem:[%s3 + $0x18] sm:$0xff]
    %v140 = vld [vmem:[#allocation2] sm:$0x1]
    %v142 = vlaneseq
    %v143 = vshrl.u32 %v142, 7
    %v144 = vsub.s32 0, %v143
    %v145 = vrot.slane %v140, %v144
    %v148 = vsel %vm90, %v134, 0
    %v151 = vsel %vm90, %v135, 0
    %153 = vmatprep.subr.mxu0 0.0
    %154 = vmatpush1.msra.mxu0 %v136
    %155 = vmatprep.subr.mxu0 0.0
    %156 = vmatpush1.msra.mxu0 %v137
    %157 = vmatprep.subr.mxu0 0.0
    %158 = vmatpush1.msra.mxu0 %v138
    %159 = vmatprep.subr.mxu0 0.0
    %160 = vmatpush1.msra.mxu0 %v139
    %161 = vmatprep.subr.mxu0 0.0
    %162 = vmatpush1.msra.mxu0 0.0
    %163 = vmatprep.subr.mxu0 0.0
    %164 = vmatpush1.msra.mxu0 0.0
    %165 = vmatprep.subr.mxu0 0.0
    %166 = vmatpush1.msra.mxu0 0.0
    %167 = vmatprep.subr.mxu0 0.0
    %168 = vmatpush1.msra.mxu0 0.0
    %169 = vmatprep.subr.mxu0 0.0
    %170 = vmatpush1.msra.mxu0 0.0
    %171 = vmatprep.subr.mxu0 0.0
    %172 = vmatpush1.msra.mxu0 0.0
    %173 = vmatprep.subr.mxu0 0.0
    %174 = vmatpush1.msra.mxu0 0.0
    %175 = vmatprep.subr.mxu0 0.0
    %176 = vmatpush1.msra.mxu0 0.0
    %177 = vmatprep.subr.mxu0 0.0
    %178 = vmatpush1.msra.mxu0 0.0
    %179 = vmatprep.subr.mxu0 0.0
    %180 = vmatpush1.msra.mxu0 0.0
    %181 = vmatprep.subr.mxu0 0.0
    %182 = vmatpush1.msra.mxu0 0.0
    %183 = vmatprep.subr.mxu0 0.0
    %184 = vmatpush1.msra.mxu0 0.0
    %185 = vmatprep.subr.mxu0 0.0
    %186 = vmatpush1.msra.mxu0 0.0
    %187 = vmatprep.subr.mxu0 0.0
    %188 = vmatpush1.msra.mxu0 0.0
    %189 = vmatprep.subr.mxu0 0.0
    %190 = vmatpush1.msra.mxu0 0.0
    %191 = vmatprep.subr.mxu0 0.0
    %192 = vmatpush1.msra.mxu0 0.0
    %193 = vmatprep.subr.mxu0 0.0
    %194 = vmatpush1.msra.mxu0 0.0
    %195 = vmatprep.subr.mxu0 0.0
    %196 = vmatpush1.msra.mxu0 0.0
    %197 = vmatprep.subr.mxu0 0.0
    %198 = vmatpush1.msra.mxu0 0.0
    %199 = vmatprep.subr.mxu0 0.0
    %200 = vmatpush1.msra.mxu0 0.0
    %201 = vmatprep.subr.mxu0 0.0
    %202 = vmatpush1.msra.mxu0 0.0
    %203 = vmatprep.subr.mxu0 0.0
    %204 = vmatpush1.msra.mxu0 0.0
    %205 = vmatprep.subr.mxu0 0.0
    %206 = vmatpush1.msra.mxu0 0.0
    %207 = vmatprep.subr.mxu0 0.0
    %208 = vmatpush1.msra.mxu0 0.0
    %209 = vmatprep.subr.mxu0 0.0
    %210 = vmatpush1.msra.mxu0 0.0
    %211 = vmatprep.subr.mxu0 0.0
    %212 = vmatpush1.msra.mxu0 0.0
    %213 = vmatprep.subr.mxu0 0.0
    %214 = vmatpush1.msra.mxu0 0.0
    %215 = vmatprep.subr.mxu0 0.0
    %216 = vmatpush1.msra.mxu0 0.0
    %217 = vmatprep.mubr.f32.mxu0 0.0
    %218 = vmatmul.mubr.f32.gmra.mrb[0].mxu0 %v148
    %v219 = vpop.f32.mrb[0].mxu0
    %v220 = vadd.f32 %v145, %v219
    %v221 = vpop.f32.mrb[0].mxu0
    %222 = vmatprep.mubr.f32.mxu0 0.0
    %223 = vmatmul.mubr.f32.gmra.mrb[0].mxu0 %v151
    %v224 = vpop.f32.mrb[0].mxu0
    %v225 = vadd.f32 %v145, %v224
    %v226 = vpop.f32.mrb[0].mxu0
    %227 = vdwg.mxu0
    %v228 = vmul.f32 %v220, %v220
    %v229 = vmul.f32 %v225, %v225
    %v230 = vmul.f32 %v220, %v228
    %v231 = vmul.f32 %v225, %v229
    %v232 = vmul.f32 %v230, 0.044715
    %v233 = vmul.f32 %v231, 0.044715
    %v234 = vadd.f32 %v220, %v232
    %v235 = vadd.f32 %v225, %v233
    %v236 = vmul.f32 %v234, 0.7978846
    %v237 = vmul.f32 %v235, 0.7978846
    %v238 = vtanh.pop %v236
    %v239 = vtanh.pop %v237
    %v240 = vadd.f32 %v238, 1.0
    %v241 = vadd.f32 %v239, 1.0
    %v242 = vmul.f32 %v240, 0.5
    %v243 = vmul.f32 %v241, 0.5
    %v244 = vmul.f32 %v220, %v242
    %v245 = vmul.f32 %v225, %v243
    %v246 = vld [vmem:[%s5] sm:$0xff]
    %v247 = vld [vmem:[%s5 + $0x8] sm:$0xff]
    %v248 = vld [vmem:[%s5 + $0x10] sm:$0xff]
    %v249 = vld [vmem:[%s5 + $0x18] sm:$0xff]
    %v250 = vld [vmem:[#allocation5] sm:$0x1]
    %v252 = vlaneseq
    %v253 = vshrl.u32 %v252, 7
    %v254 = vsub.s32 0, %v253
    %v255 = vrot.slane %v250, %v254
    %v258 = vsel %vm90, %v244, 0
    %v261 = vsel %vm90, %v245, 0
    %263 = vmatprep.subr.mxu0 0.0
    %264 = vmatpush1.msra.mxu0 %v246
    %265 = vmatprep.subr.mxu0 0.0
    %266 = vmatpush1.msra.mxu0 %v247
    %267 = vmatprep.subr.mxu0 0.0
    %268 = vmatpush1.msra.mxu0 %v248
    %269 = vmatprep.subr.mxu0 0.0
    %270 = vmatpush1.msra.mxu0 %v249
    %271 = vmatprep.subr.mxu0 0.0
    %272 = vmatpush1.msra.mxu0 0.0
    %273 = vmatprep.subr.mxu0 0.0
    %274 = vmatpush1.msra.mxu0 0.0
    %275 = vmatprep.subr.mxu0 0.0
    %276 = vmatpush1.msra.mxu0 0.0
    %277 = vmatprep.subr.mxu0 0.0
    %278 = vmatpush1.msra.mxu0 0.0
    %279 = vmatprep.subr.mxu0 0.0
    %280 = vmatpush1.msra.mxu0 0.0
    %281 = vmatprep.subr.mxu0 0.0
    %282 = vmatpush1.msra.mxu0 0.0
    %283 = vmatprep.subr.mxu0 0.0
    %284 = vmatpush1.msra.mxu0 0.0
    %285 = vmatprep.subr.mxu0 0.0
    %286 = vmatpush1.msra.mxu0 0.0
    %287 = vmatprep.subr.mxu0 0.0
    %288 = vmatpush1.msra.mxu0 0.0
    %289 = vmatprep.subr.mxu0 0.0
    %290 = vmatpush1.msra.mxu0 0.0
    %291 = vmatprep.subr.mxu0 0.0
    %292 = vmatpush1.msra.mxu0 0.0
    %293 = vmatprep.subr.mxu0 0.0
    %294 = vmatpush1.msra.mxu0 0.0
    %295 = vmatprep.subr.mxu0 0.0
    %296 = vmatpush1.msra.mxu0 0.0
    %297 = vmatprep.subr.mxu0 0.0
    %298 = vmatpush1.msra.mxu0 0.0
    %299 = vmatprep.subr.mxu0 0.0
    %300 = vmatpush1.msra.mxu0 0.0
    %301 = vmatprep.subr.mxu0 0.0
    %302 = vmatpush1.msra.mxu0 0.0
    %303 = vmatprep.subr.mxu0 0.0
    %304 = vmatpush1.msra.mxu0 0.0
    %305 = vmatprep.subr.mxu0 0.0
    %306 = vmatpush1.msra.mxu0 0.0
    %307 = vmatprep.subr.mxu0 0.0
    %308 = vmatpush1.msra.mxu0 0.0
    %309 = vmatprep.subr.mxu0 0.0
    %310 = vmatpush1.msra.mxu0 0.0
    %311 = vmatprep.subr.mxu0 0.0
    %312 = vmatpush1.msra.mxu0 0.0
    %313 = vmatprep.subr.mxu0 0.0
    %314 = vmatpush1.msra.mxu0 0.0
    %315 = vmatprep.subr.mxu0 0.0
    %316 = vmatpush1.msra.mxu0 0.0
    %317 = vmatprep.subr.mxu0 0.0
    %318 = vmatpush1.msra.mxu0 0.0
    %319 = vmatprep.subr.mxu0 0.0
    %320 = vmatpush1.msra.mxu0 0.0
    %321 = vmatprep.subr.mxu0 0.0
    %322 = vmatpush1.msra.mxu0 0.0
    %323 = vmatprep.subr.mxu0 0.0
    %324 = vmatpush1.msra.mxu0 0.0
    %325 = vmatprep.subr.mxu0 0.0
    %326 = vmatpush1.msra.mxu0 0.0
    %327 = vmatprep.mubr.f32.mxu0 0.0
    %328 = vmatmul.mubr.f32.gmra.mrb[0].mxu0 %v258
    %v329 = vpop.f32.mrb[0].mxu0
    %v330 = vadd.f32 %v255, %v329
    %v331 = vpop.f32.mrb[0].mxu0
    %332 = vmatprep.mubr.f32.mxu0 0.0
    %333 = vmatmul.mubr.f32.gmra.mrb[0].mxu0 %v261
    %v334 = vpop.f32.mrb[0].mxu0
    %v335 = vadd.f32 %v255, %v334
    %v336 = vpop.f32.mrb[0].mxu0
    %337 = vdwg.mxu0
    %v338 = vld [vmem:[#allocation7] sm:$0xff]
    %v339 = vld [vmem:[#allocation7 + $0x8] sm:$0xff]
    %v340 = vld [vmem:[#allocation8] sm:$0x1]
    %v342 = vlaneseq
    %v343 = vshrl.u32 %v342, 7
    %v344 = vsub.s32 0, %v343
    %v345 = vrot.slane %v340, %v344
    %vm347 = vcmask 130048
    %v349 = vsel %vm347, %v330, 0
    %v352 = vsel %vm347, %v335, 0
    %354 = vmatprep.subr.mxu0 0.0
    %355 = vmatpush1.msra.mxu0 %v338
    %356 = vmatprep.subr.mxu0 0.0
    %357 = vmatpush1.msra.mxu0 %v339
    %358 = vmatprep.subr.mxu0 0.0
    %359 = vmatpush1.msra.mxu0 0.0
    %360 = vmatprep.subr.mxu0 0.0
    %361 = vmatpush1.msra.mxu0 0.0
    %362 = vmatprep.subr.mxu0 0.0
    %363 = vmatpush1.msra.mxu0 0.0
    %364 = vmatprep.subr.mxu0 0.0
    %365 = vmatpush1.msra.mxu0 0.0
    %366 = vmatprep.subr.mxu0 0.0
    %367 = vmatpush1.msra.mxu0 0.0
    %368 = vmatprep.subr.mxu0 0.0
    %369 = vmatpush1.msra.mxu0 0.0
    %370 = vmatprep.subr.mxu0 0.0
    %371 = vmatpush1.msra.mxu0 0.0
    %372 = vmatprep.subr.mxu0 0.0
    %373 = vmatpush1.msra.mxu0 0.0
    %374 = vmatprep.subr.mxu0 0.0
    %375 = vmatpush1.msra.mxu0 0.0
    %376 = vmatprep.subr.mxu0 0.0
    %377 = vmatpush1.msra.mxu0 0.0
    %378 = vmatprep.subr.mxu0 0.0
    %379 = vmatpush1.msra.mxu0 0.0
    %380 = vmatprep.subr.mxu0 0.0
    %381 = vmatpush1.msra.mxu0 0.0
    %382 = vmatprep.subr.mxu0 0.0
    %383 = vmatpush1.msra.mxu0 0.0
    %384 = vmatprep.subr.mxu0 0.0
    %385 = vmatpush1.msra.mxu0 0.0
    %386 = vmatprep.subr.mxu0 0.0
    %387 = vmatpush1.msra.mxu0 0.0
    %388 = vmatprep.subr.mxu0 0.0
    %389 = vmatpush1.msra.mxu0 0.0
    %390 = vmatprep.subr.mxu0 0.0
    %391 = vmatpush1.msra.mxu0 0.0
    %392 = vmatprep.subr.mxu0 0.0
    %393 = vmatpush1.msra.mxu0 0.0
    %394 = vmatprep.subr.mxu0 0.0
    %395 = vmatpush1.msra.mxu0 0.0
    %396 = vmatprep.subr.mxu0 0.0
    %397 = vmatpush1.msra.mxu0 0.0
    %398 = vmatprep.subr.mxu0 0.0
    %399 = vmatpush1.msra.mxu0 0.0
    %400 = vmatprep.subr.mxu0 0.0
    %401 = vmatpush1.msra.mxu0 0.0
    %402 = vmatprep.subr.mxu0 0.0
    %403 = vmatpush1.msra.mxu0 0.0
    %404 = vmatprep.subr.mxu0 0.0
    %405 = vmatpush1.msra.mxu0 0.0
    %406 = vmatprep.subr.mxu0 0.0
    %407 = vmatpush1.msra.mxu0 0.0
    %408 = vmatprep.subr.mxu0 0.0
    %409 = vmatpush1.msra.mxu0 0.0
    %410 = vmatprep.subr.mxu0 0.0
    %411 = vmatpush1.msra.mxu0 0.0
    %412 = vmatprep.subr.mxu0 0.0
    %413 = vmatpush1.msra.mxu0 0.0
    %414 = vmatprep.subr.mxu0 0.0
    %415 = vmatpush1.msra.mxu0 0.0
    %416 = vmatprep.subr.mxu0 0.0
    %417 = vmatpush1.msra.mxu0 0.0
    %418 = vmatprep.mubr.f32.mxu0 0.0
    %419 = vmatmul.mubr.f32.gmra.mrb[0].mxu0 %v349
    %v420 = vpop.f32.mrb[0].mxu0
    %v421 = vadd.f32 %v345, %v420
    %v422 = vpop.f32.mrb[0].mxu0
    %423 = vmatprep.mubr.f32.mxu0 0.0
    %424 = vmatmul.mubr.f32.gmra.mrb[0].mxu0 %v352
    %v425 = vpop.f32.mrb[0].mxu0
    %v426 = vadd.f32 %v345, %v425
    %v427 = vpop.f32.mrb[0].mxu0
    %428 = vdwg.mxu0
    %v429 = vmul.f32 %v421, %v421
    %v430 = vmul.f32 %v426, %v426
    %v431 = vmul.f32 %v421, %v429
    %v432 = vmul.f32 %v426, %v430
    %v433 = vmul.f32 %v431, 0.044715
    %v434 = vmul.f32 %v432, 0.044715
    %v435 = vadd.f32 %v421, %v433
    %v436 = vadd.f32 %v426, %v434
    %v437 = vmul.f32 %v435, 0.7978846
    %v438 = vmul.f32 %v436, 0.7978846
    %v439 = vtanh.pop %v437
    %v440 = vtanh.pop %v438
    %v441 = vadd.f32 %v439, 1.0
    %v442 = vadd.f32 %v440, 1.0
    %v443 = vmul.f32 %v441, 0.5
    %v444 = vmul.f32 %v442, 0.5
    %v445 = vmul.f32 %v421, %v443
    %v446 = vmul.f32 %v426, %v444
    %v447 = vld [vmem:[%s9] sm:$0xff]
    %v448 = vld [vmem:[%s9 + $0x8] sm:$0xff]
    %v449 = vld [vmem:[%s10] sm:$0x1]
    %v451 = vlaneseq
    %v452 = vshrl.u32 %v451, 7
    %v453 = vsub.s32 0, %v452
    %v454 = vrot.slane %v449, %v453
    %v457 = vsel %vm347, %v445, 0
    %v460 = vsel %vm347, %v446, 0
    %462 = vmatprep.subr.mxu0 0.0
    %463 = vmatpush1.msra.mxu0 %v447
    %464 = vmatprep.subr.mxu0 0.0
    %465 = vmatpush1.msra.mxu0 %v448
    %466 = vmatprep.subr.mxu0 0.0
    %467 = vmatpush1.msra.mxu0 0.0
    %468 = vmatprep.subr.mxu0 0.0
    %469 = vmatpush1.msra.mxu0 0.0
    %470 = vmatprep.subr.mxu0 0.0
    %471 = vmatpush1.msra.mxu0 0.0
    %472 = vmatprep.subr.mxu0 0.0
    %473 = vmatpush1.msra.mxu0 0.0
    %474 = vmatprep.subr.mxu0 0.0
    %475 = vmatpush1.msra.mxu0 0.0
    %476 = vmatprep.subr.mxu0 0.0
    %477 = vmatpush1.msra.mxu0 0.0
    %478 = vmatprep.subr.mxu0 0.0
    %479 = vmatpush1.msra.mxu0 0.0
    %480 = vmatprep.subr.mxu0 0.0
    %481 = vmatpush1.msra.mxu0 0.0
    %482 = vmatprep.subr.mxu0 0.0
    %483 = vmatpush1.msra.mxu0 0.0
    %484 = vmatprep.subr.mxu0 0.0
    %485 = vmatpush1.msra.mxu0 0.0
    %486 = vmatprep.subr.mxu0 0.0
    %487 = vmatpush1.msra.mxu0 0.0
    %488 = vmatprep.subr.mxu0 0.0
    %489 = vmatpush1.msra.mxu0 0.0
    %490 = vmatprep.subr.mxu0 0.0
    %491 = vmatpush1.msra.mxu0 0.0
    %492 = vmatprep.subr.mxu0 0.0
    %493 = vmatpush1.msra.mxu0 0.0
    %494 = vmatprep.subr.mxu0 0.0
    %495 = vmatpush1.msra.mxu0 0.0
    %496 = vmatprep.subr.mxu0 0.0
    %497 = vmatpush1.msra.mxu0 0.0
    %498 = vmatprep.subr.mxu0 0.0
    %499 = vmatpush1.msra.mxu0 0.0
    %500 = vmatprep.subr.mxu0 0.0
    %501 = vmatpush1.msra.mxu0 0.0
    %502 = vmatprep.subr.mxu0 0.0
    %503 = vmatpush1.msra.mxu0 0.0
    %504 = vmatprep.subr.mxu0 0.0
    %505 = vmatpush1.msra.mxu0 0.0
    %506 = vmatprep.subr.mxu0 0.0
    %507 = vmatpush1.msra.mxu0 0.0
    %508 = vmatprep.subr.mxu0 0.0
    %509 = vmatpush1.msra.mxu0 0.0
    %510 = vmatprep.subr.mxu0 0.0
    %511 = vmatpush1.msra.mxu0 0.0
    %512 = vmatprep.subr.mxu0 0.0
    %513 = vmatpush1.msra.mxu0 0.0
    %514 = vmatprep.subr.mxu0 0.0
    %515 = vmatpush1.msra.mxu0 0.0
    %516 = vmatprep.subr.mxu0 0.0
    %517 = vmatpush1.msra.mxu0 0.0
    %518 = vmatprep.subr.mxu0 0.0
    %519 = vmatpush1.msra.mxu0 0.0
    %520 = vmatprep.subr.mxu0 0.0
    %521 = vmatpush1.msra.mxu0 0.0
    %522 = vmatprep.subr.mxu0 0.0
    %523 = vmatpush1.msra.mxu0 0.0
    %524 = vmatprep.subr.mxu0 0.0
    %525 = vmatpush1.msra.mxu0 0.0
    %526 = vmatprep.mubr.f32.mxu0 0.0
    %527 = vmatmul.mubr.f32.gmra.mrb[0].mxu0 %v457
    %v528 = vpop.f32.mrb[0].mxu0
    %v529 = vadd.f32 %v454, %v528
    %v530 = vpop.f32.mrb[0].mxu0
    %531 = vmatprep.mubr.f32.mxu0 0.0
    %532 = vmatmul.mubr.f32.gmra.mrb[0].mxu0 %v460
    %v533 = vpop.f32.mrb[0].mxu0
    %v534 = vadd.f32 %v454, %v533
    %v535 = vpop.f32.mrb[0].mxu0
    %536 = vdwg.mxu0
    %537 = vst.msk [vmem:[#allocation10] sm:$0xff] %vm347, %v529
    %538 = vst.msk [vmem:[#allocation10 + $0x8] sm:$0xff] %vm347, %v534
    // Predicated region
    $region62: #{tpu_custom_call.1} parent=1 // pred_check
      _
    $region63: #{tpu_custom_call.1} parent=1 // pred_check_branch
      %540 = sbr.rel (0) target = $region65
    $region64: #{tpu_custom_call.1} parent=1 // pred_region
      %s542 = ssub.s32 256, 256
      %543 = vsyncadd [#allocation4], %s542
      %s544 = sshll.u32 [#allocation10], 4
      %s545 = int_to_ptr.vmem [resolvable:$true] %s544
      %550 = dma.vmem_to_hbm [thread:$0]  %s545, 256, %s11, [#allocation4], 128, 128, 8
    $region65: #{tpu_custom_call.1} parent=1 // pred_fallthru
      _
    // Predicated region
    $region66: #{tpu_custom_call.1} parent=1 // pred_check
      _
    $region67: #{tpu_custom_call.1} parent=1 // pred_check_branch
      %552 = sbr.rel (0) target = $region69
    $region68: #{tpu_custom_call.1} parent=1 // pred_region
      %553 = dma.done [#allocation4], 256
    $region69: #{tpu_custom_call.1} parent=1 // pred_fallthru
      _
    %554 = vsyncpa [#allocation3], 1
    %555 = vsyncpa [#allocation6], 1
    %556 = vsyncpa [#allocation9], 1
    %557 = vsyncpa [#allocation4], 1

</llo_original>
